<compile_context>
chip_gen: v7x
topology: tpu7x:2x2x1
jax: 0.10.0
libtpu: 0.0.40
codegen_flags: <defaults>
</compile_context>

<pallas_src>
import math
import numpy as np
import jax
import jax.numpy as jnp
from jax.experimental import pallas as pl
from jax.experimental.pallas import tpu as pltpu

# ---------------- deterministic "parameters" (from __init__) ----------------
ALPHA = 1.8
RGB_FROM_HED = np.array([[0.65, 0.70, 0.29],
                         [0.07, 0.99, 0.11],
                         [0.27, 0.57, 0.78]], dtype=np.float32)
HED_FROM_RGB = np.linalg.inv(RGB_FROM_HED).astype(np.float32)
COEFFS = np.array([0.2125, 0.7154, 0.0721], dtype=np.float32)   # sums to 1.0
LOG_ADJUST = float(np.log(np.float32(1e-6)))                    # log(1e-6) < 0
ADJUST_CAL = float(10.0 ** (-(math.e ** (1.0 / ALPHA))))        # 10**(-e**(1/alpha))
THRESH_FOD = 0.15
COS_EPS = 1e-8
INV_LN10 = 1.0 / math.log(10.0)

# Only the DAB column of hed_from_rgb / DAB row of rgb_from_hed are needed.
H02 = float(HED_FROM_RGB[0, 2])
H12 = float(HED_FROM_RGB[1, 2])
H22 = float(HED_FROM_RGB[2, 2])
R20 = float(RGB_FROM_HED[2, 0])
R21 = float(RGB_FROM_HED[2, 1])
R22 = float(RGB_FROM_HED[2, 2])
C0, C1, C2 = (float(c) for c in COEFFS)

NCORES = 2                      # megacore split (v7x); harmless on 1-TC chips
TARGET_S = 64                   # sublane blocks / grid step -> 64*128 = 8192 px
VMEM_BUDGET = 20 * 1024 * 1024  # inputs (double-buffered) + resident outputs
VMEM_LIMIT = 32 * 1024 * 1024   # safe on v5e/v6e (128 MiB) and v7x (64 MiB)


def _cdiv(a, b):
    return -(-a // b)


def _round_up(a, m):
    return _cdiv(a, m) * m


def _fod(x0, x1, x2):
    """Per-pixel FOD (and thresholded FOD) from the three RGB channels.

    Follows separate_stains -> combine_stains (DAB only) -> rgb2gray ->
    log10 / pow(alpha) of the reference, with algebraic simplifications that
    shave work off the saturated EUP/VALU slots:
      * d = max(sum_k ln(max(x_k,1e-6))*h_k2 / log_adjust, 0) followed by a
        multiply with log_adjust collapses to e = min(d', 0) (log_adjust < 0),
        removing three divides and one max per pixel;
      * exp(e*r) with e <= 0, r > 0 is already in (0,1] and COEFFS sum to
        exactly 1.0, so the reference's clips to [0,1] are no-ops (keep this
        comment if COEFFS / RGB_FROM_HED ever change);
      * log10(1/(g+c)) == -ln(g+c)/ln(10) removes a divide.
    """
    dp = (jnp.log(jnp.maximum(x0, 1e-6)) * H02
          + jnp.log(jnp.maximum(x1, 1e-6)) * H12
          + jnp.log(jnp.maximum(x2, 1e-6)) * H22)
    e = jnp.minimum(dp, 0.0)                       # == d * log_adjust  (<= 0)
    grey = (jnp.exp(e * R20) * C0
            + jnp.exp(e * R21) * C1
            + jnp.exp(e * R22) * C2)               # in (0, 1]
    fod = jnp.maximum(-INV_LN10 * jnp.log(grey + ADJUST_CAL), 0.0)
    # fod ** alpha with torch semantics (0 ** alpha == 0, alpha non-integer)
    fod_pow = jnp.where(fod > 0.0,
                        jnp.exp(ALPHA * jnp.log(jnp.maximum(fod, 1e-30))),
                        0.0)
    fod_relu = jnp.where(fod_pow < THRESH_FOD, 0.0, fod_pow)
    return fod_pow, fod_relu


def _make_kernel(B, S):
    """Build the PCSM accumulation kernel for static batch B / tile S."""
    # TODO(synk): for large batch (B >~ 32) the unrolled O(B^2) pairwise
    # products start to rival the EUP work; an MXU-based Gram would be better.
    pairs = [(i, j) for i in range(B) for j in range(i, B)]
    nsub = S // 8

    def fold(v):                       # (S, 128) -> (8, 128); VALU-only adds
        return jnp.sum(v.reshape(nsub, 8, 128), axis=0)

    def kernel(tgt_ref, gen_ref, ga_ref, gb_ref, sa_ref, sb_ref):
        @pl.when(pl.program_id(1) == 0)
        def _init():
            ga_ref[...] = jnp.zeros_like(ga_ref)
            gb_ref[...] = jnp.zeros_like(gb_ref)
            sa_ref[...] = jnp.zeros_like(sa_ref)
            sb_ref[...] = jnp.zeros_like(sb_ref)

        def accumulate(x_ref, g_ref, s_ref):
            x = x_ref[...]                                    # (B, 3, S, 128)
            fod, fod_relu = _fod(x[:, 0], x[:, 1], x[:, 2])   # (B, S, 128)
            for b in range(B):
                s_ref[b] += fold(fod_relu[b])                 # per-image sums
            for p, (i, j) in enumerate(pairs):                # Gram (upper tri)
                g_ref[p] += fold(fod[i] * fod[j])

        accumulate(tgt_ref, ga_ref, sa_ref)
        accumulate(gen_ref, gb_ref, sb_ref)

    return kernel


def pcsm_loss(src, tgt, gen, src_feats=None, tgt_feats=None, gen_feats=None):
    """JAX/Pallas equivalent of PCSM_Loss.forward (the *_feats are unused)."""
    B, C, H, W = tgt.shape
    assert C == 3
    HW = H * W
    n128 = _cdiv(HW, 128)                 # 128-pixel lane blocks actually needed
    NP = B * (B + 1) // 2                 # upper-triangular Gram entries

    # Sublane blocks per grid step: target ~8192 px/step, capped so
    # (double-buffered inputs + resident accumulators) stay under the scoped
    # VMEM limit on every generation (incl. v7x's smaller VMEM).
    out_bytes = 2 * 2 * (NP + B) * 8 * 128 * 4
    in_bytes_per_s = 2 * 2 * B * 3 * 128 * 4
    s_cap = max(8, ((VMEM_BUDGET - out_bytes) // in_bytes_per_s) // 8 * 8)
    s_max = max(8, min(TARGET_S, s_cap))
    n_steps = _cdiv(n128, NCORES * s_max)
    S = min(s_max, _round_up(_cdiv(n128, NCORES * n_steps), 8))
    n_blocks = NCORES * n_steps * S
    P = n_blocks * 128

    def prep(x):          # NCHW -> (B, 3, n_blocks, 128); pure reshape + pad
        x = x.astype(jnp.float32).reshape(B, 3, HW)
        if P != HW:
            # white pixels -> FOD == 0 exactly -> no effect on Gram / sums
            x = jnp.pad(x, ((0, 0), (0, 0), (0, P - HW)), constant_values=1.0)
        return x.reshape(B, 3, n_blocks, 128)

    in_spec = pl.BlockSpec((B, 3, S, 128),
                           lambda c, k: (0, 0, c * n_steps + k, 0))

    gram_a_p, gram_b_p, sum_a_p, sum_b_p = pl.pallas_call(
        _make_kernel(B, S),
        out_shape=(
            jax.ShapeDtypeStruct((NCORES, NP, 8, 128), jnp.float32),
            jax.ShapeDtypeStruct((NCORES, NP, 8, 128), jnp.float32),
            jax.ShapeDtypeStruct((NCORES, B, 8, 128), jnp.float32),
            jax.ShapeDtypeStruct((NCORES, B, 8, 128), jnp.float32),
        ),
        grid_spec=pltpu.PrefetchScalarGridSpec(
            num_scalar_prefetch=0,
            grid=(NCORES, n_steps),
            in_specs=[in_spec, in_spec],
            out_specs=[
                pl.BlockSpec((None, NP, 8, 128), lambda c, k: (c, 0, 0, 0)),
                pl.BlockSpec((None, NP, 8, 128), lambda c, k: (c, 0, 0, 0)),
                pl.BlockSpec((None, B, 8, 128), lambda c, k: (c, 0, 0, 0)),
                pl.BlockSpec((None, B, 8, 128), lambda c, k: (c, 0, 0, 0)),
            ],
        ),
        compiler_params=pltpu.CompilerParams(
            dimension_semantics=("parallel", "arbitrary"),
            vmem_limit_bytes=VMEM_LIMIT,
        ),
    )(prep(tgt), prep(gen))

    # ---- tiny (B,B)-scale glue: final reductions, cosine, L1, MSE ----------
    pair_a = jnp.sum(gram_a_p, axis=(0, 2, 3))     # (NP,)
    pair_b = jnp.sum(gram_b_p, axis=(0, 2, 3))
    sum_a = jnp.sum(sum_a_p, axis=(0, 2, 3))       # (B,)
    sum_b = jnp.sum(sum_b_p, axis=(0, 2, 3))

    iu, ju = np.triu_indices(B)                    # same order as kernel pairs

    def symmetrize(p):
        g = jnp.zeros((B, B), jnp.float32)
        return g.at[iu, ju].set(p).at[ju, iu].set(p)

    gram_a = symmetrize(pair_a)
    gram_b = symmetrize(pair_b)

    # torch F.cosine_similarity clamps the *product* of norms by eps
    # (clamp_min(eps*eps) on the squared-norm product).
    norm_a = jnp.sqrt(jnp.diagonal(gram_a))
    norm_b = jnp.sqrt(jnp.diagonal(gram_b))
    cos_a = gram_a / jnp.maximum(norm_a[:, None] * norm_a[None, :], COS_EPS)
    cos_b = gram_b / jnp.maximum(norm_b[:, None] * norm_b[None, :], COS_EPS)

    l1 = jnp.mean(jnp.abs(cos_a - cos_b))          # F.l1_loss (mean)
    mse = jnp.mean((sum_a - sum_b) ** 2)           # nn.MSELoss (mean)
    # NOTE: as in the reference, the MSE term is normalized by *src*'s spatial
    # size even though the sums are accumulated over tgt/gen pixels.
    return l1 + mse / float((src.shape[2] * src.shape[3]) ** 2)


if __name__ == "__main__":
    key = jax.random.PRNGKey(0)
    k1, k2, k3 = jax.random.split(key, 3)
    B, C, H, W = 2, 3, 16, 16
    src = jax.random.uniform(k1, (B, C, H, W), jnp.float32)
    tgt = jax.random.uniform(k2, (B, C, H, W), jnp.float32)
    gen = jax.random.uniform(k3, (B, C, H, W), jnp.float32)
    # feats are accepted for signature parity but unused by the reference forward.
    feats = jnp.zeros((B, 8), jnp.float32)

    loss = pcsm_loss(src, tgt, gen, feats, feats, feats)
    jax.block_until_ready(loss)
    print("KERNEL_OK")
</pallas_src>

<mosaic_0001>
module attributes {stable_mosaic.version = 11 : i64} {
  func.func @kernel(%arg0: i32, %arg1: i32, %arg2: memref<2x3x8x128xf32, #tpu.memory_space<vmem>>, %arg3: memref<2x3x8x128xf32, #tpu.memory_space<vmem>>, %arg4: memref<1x3x8x128xf32, #tpu.memory_space<vmem>>, %arg5: memref<1x3x8x128xf32, #tpu.memory_space<vmem>>, %arg6: memref<1x2x8x128xf32, #tpu.memory_space<vmem>>, %arg7: memref<1x2x8x128xf32, #tpu.memory_space<vmem>>) attributes {dimension_semantics = [#tpu.dimension_semantics<parallel>, #tpu.dimension_semantics<arbitrary>], iteration_bounds = array<i64: 2, 1>, scalar_prefetch = 0 : i64, scratch_operands = 0 : i64, tpu.core_type = #tpu.core_type<tc>, window_params = [{transform_indices = @transform_0, window_bounds = array<i64: 2, 3, 8, 128>}, {transform_indices = @transform_1, window_bounds = array<i64: 2, 3, 8, 128>}, {transform_indices = @transform_2, window_bounds = array<i64: 1, 3, 8, 128>}, {transform_indices = @transform_3, window_bounds = array<i64: 1, 3, 8, 128>}, {transform_indices = @transform_4, window_bounds = array<i64: 1, 2, 8, 128>}, {transform_indices = @transform_5, window_bounds = array<i64: 1, 2, 8, 128>}]} {
    %c0_i32 = arith.constant 0 : i32
    %0 = arith.cmpi eq, %arg1, %c0_i32 : i32
    %1 = arith.extui %0 : i1 to i32
    %c0_i32_0 = arith.constant 0 : i32
    %2 = arith.cmpi ne, %1, %c0_i32_0 : i32
    scf.if %2 {
      %cst_139 = arith.constant 0.000000e+00 : f32
      %249 = vector.broadcast %cst_139 : f32 to vector<3x8x128xf32>
      %c0_140 = arith.constant 0 : index
      %c0_141 = arith.constant 0 : index
      %c0_142 = arith.constant 0 : index
      %c0_143 = arith.constant 0 : index
      %250 = vector.load %arg4[%c0_140, %c0_141, %c0_142, %c0_143] : memref<1x3x8x128xf32, #tpu.memory_space<vmem>>, vector<1x3x8x128xf32>
      %251 = vector.shape_cast %250 : vector<1x3x8x128xf32> to vector<3x8x128xf32>
      %252 = vector.shape_cast %249 : vector<3x8x128xf32> to vector<1x3x8x128xf32>
      tpu.vector_store %arg4[%c0_140, %c0_141, %c0_142, %c0_143], %252 {strides = array<i32>} : memref<1x3x8x128xf32, #tpu.memory_space<vmem>>, vector<1x3x8x128xf32>,
      %cst_144 = arith.constant 0.000000e+00 : f32
      %253 = vector.broadcast %cst_144 : f32 to vector<3x8x128xf32>
      %c0_145 = arith.constant 0 : index
      %c0_146 = arith.constant 0 : index
      %c0_147 = arith.constant 0 : index
      %c0_148 = arith.constant 0 : index
      %254 = vector.load %arg5[%c0_145, %c0_146, %c0_147, %c0_148] : memref<1x3x8x128xf32, #tpu.memory_space<vmem>>, vector<1x3x8x128xf32>
      %255 = vector.shape_cast %254 : vector<1x3x8x128xf32> to vector<3x8x128xf32>
      %256 = vector.shape_cast %253 : vector<3x8x128xf32> to vector<1x3x8x128xf32>
      tpu.vector_store %arg5[%c0_145, %c0_146, %c0_147, %c0_148], %256 {strides = array<i32>} : memref<1x3x8x128xf32, #tpu.memory_space<vmem>>, vector<1x3x8x128xf32>,
      %cst_149 = arith.constant 0.000000e+00 : f32
      %257 = vector.broadcast %cst_149 : f32 to vector<2x8x128xf32>
      %c0_150 = arith.constant 0 : index
      %c0_151 = arith.constant 0 : index
      %c0_152 = arith.constant 0 : index
      %c0_153 = arith.constant 0 : index
      %258 = vector.load %arg6[%c0_150, %c0_151, %c0_152, %c0_153] : memref<1x2x8x128xf32, #tpu.memory_space<vmem>>, vector<1x2x8x128xf32>
      %259 = vector.shape_cast %258 : vector<1x2x8x128xf32> to vector<2x8x128xf32>
      %260 = vector.shape_cast %257 : vector<2x8x128xf32> to vector<1x2x8x128xf32>
      tpu.vector_store %arg6[%c0_150, %c0_151, %c0_152, %c0_153], %260 {strides = array<i32>} : memref<1x2x8x128xf32, #tpu.memory_space<vmem>>, vector<1x2x8x128xf32>,
      %cst_154 = arith.constant 0.000000e+00 : f32
      %261 = vector.broadcast %cst_154 : f32 to vector<2x8x128xf32>
      %c0_155 = arith.constant 0 : index
      %c0_156 = arith.constant 0 : index
      %c0_157 = arith.constant 0 : index
      %c0_158 = arith.constant 0 : index
      %262 = vector.load %arg7[%c0_155, %c0_156, %c0_157, %c0_158] : memref<1x2x8x128xf32, #tpu.memory_space<vmem>>, vector<1x2x8x128xf32>
      %263 = vector.shape_cast %262 : vector<1x2x8x128xf32> to vector<2x8x128xf32>
      %264 = vector.shape_cast %261 : vector<2x8x128xf32> to vector<1x2x8x128xf32>
      tpu.vector_store %arg7[%c0_155, %c0_156, %c0_157, %c0_158], %264 {strides = array<i32>} : memref<1x2x8x128xf32, #tpu.memory_space<vmem>>, vector<1x2x8x128xf32>,
    } else {
    }
    %c0 = arith.constant 0 : index
    %c0_1 = arith.constant 0 : index
    %c0_2 = arith.constant 0 : index
    %c0_3 = arith.constant 0 : index
    %3 = vector.load %arg2[%c0, %c0_1, %c0_2, %c0_3] : memref<2x3x8x128xf32, #tpu.memory_space<vmem>>, vector<2x3x8x128xf32>
    %4 = vector.extract_strided_slice %3 {offsets = [0, 0, 0, 0], sizes = [2, 1, 8, 128], strides = [1, 1, 1, 1]} : vector<2x3x8x128xf32> to vector<2x1x8x128xf32>
    %5 = vector.shape_cast %4 : vector<2x1x8x128xf32> to vector<2x8x128xf32>
    %6 = vector.extract_strided_slice %3 {offsets = [0, 1, 0, 0], sizes = [2, 1, 8, 128], strides = [1, 1, 1, 1]} : vector<2x3x8x128xf32> to vector<2x1x8x128xf32>
    %7 = vector.shape_cast %6 : vector<2x1x8x128xf32> to vector<2x8x128xf32>
    %8 = vector.extract_strided_slice %3 {offsets = [0, 2, 0, 0], sizes = [2, 1, 8, 128], strides = [1, 1, 1, 1]} : vector<2x3x8x128xf32> to vector<2x1x8x128xf32>
    %9 = vector.shape_cast %8 : vector<2x1x8x128xf32> to vector<2x8x128xf32>
    %cst = arith.constant 9.99999997E-7 : f32
    %10 = vector.broadcast %cst : f32 to vector<2x8x128xf32>
    %11 = arith.maximumf %5, %10 : vector<2x8x128xf32>
    %12 = math.log %11 : vector<2x8x128xf32>
    %cst_4 = arith.constant -0.556115866 : f32
    %13 = vector.broadcast %cst_4 : f32 to vector<2x8x128xf32>
    %14 = arith.mulf %12, %13 : vector<2x8x128xf32>
    %cst_5 = arith.constant 9.99999997E-7 : f32
    %15 = vector.broadcast %cst_5 : f32 to vector<2x8x128xf32>
    %16 = arith.maximumf %7, %15 : vector<2x8x128xf32>
    %17 = math.log %16 : vector<2x8x128xf32>
    %cst_6 = arith.constant -0.135521799 : f32
    %18 = vector.broadcast %cst_6 : f32 to vector<2x8x128xf32>
    %19 = arith.mulf %17, %18 : vector<2x8x128xf32>
    %20 = arith.addf %14, %19 : vector<2x8x128xf32>
    %cst_7 = arith.constant 9.99999997E-7 : f32
    %21 = vector.broadcast %cst_7 : f32 to vector<2x8x128xf32>
    %22 = arith.maximumf %9, %21 : vector<2x8x128xf32>
    %23 = math.log %22 : vector<2x8x128xf32>
    %cst_8 = arith.constant 1.57358813 : f32
    %24 = vector.broadcast %cst_8 : f32 to vector<2x8x128xf32>
    %25 = arith.mulf %23, %24 : vector<2x8x128xf32>
    %26 = arith.addf %20, %25 : vector<2x8x128xf32>
    %cst_9 = arith.constant 0.000000e+00 : f32
    %27 = vector.broadcast %cst_9 : f32 to vector<2x8x128xf32>
    %28 = arith.minimumf %26, %27 : vector<2x8x128xf32>
    %cst_10 = arith.constant 2.700000e-01 : f32
    %29 = vector.broadcast %cst_10 : f32 to vector<2x8x128xf32>
    %30 = arith.mulf %28, %29 : vector<2x8x128xf32>
    %31 = math.exp %30 : vector<2x8x128xf32>
    %cst_11 = arith.constant 2.125000e-01 : f32
    %32 = vector.broadcast %cst_11 : f32 to vector<2x8x128xf32>
    %33 = arith.mulf %31, %32 : vector<2x8x128xf32>
    %cst_12 = arith.constant 5.700000e-01 : f32
    %34 = vector.broadcast %cst_12 : f32 to vector<2x8x128xf32>
    %35 = arith.mulf %28, %34 : vector<2x8x128xf32>
    %36 = math.exp %35 : vector<2x8x128xf32>
    %cst_13 = arith.constant 7.154000e-01 : f32
    %37 = vector.broadcast %cst_13 : f32 to vector<2x8x128xf32>
    %38 = arith.mulf %36, %37 : vector<2x8x128xf32>
    %39 = arith.addf %33, %38 : vector<2x8x128xf32>
    %cst_14 = arith.constant 7.800000e-01 : f32
    %40 = vector.broadcast %cst_14 : f32 to vector<2x8x128xf32>
    %41 = arith.mulf %28, %40 : vector<2x8x128xf32>
    %42 = math.exp %41 : vector<2x8x128xf32>
    %cst_15 = arith.constant 7.210000e-02 : f32
    %43 = vector.broadcast %cst_15 : f32 to vector<2x8x128xf32>
    %44 = arith.mulf %42, %43 : vector<2x8x128xf32>
    %45 = arith.addf %39, %44 : vector<2x8x128xf32>
    %cst_16 = arith.constant 0.0180755276 : f32
    %46 = vector.broadcast %cst_16 : f32 to vector<2x8x128xf32>
    %47 = arith.addf %45, %46 : vector<2x8x128xf32>
    %48 = math.log %47 : vector<2x8x128xf32>
    %cst_17 = arith.constant -0.434294492 : f32
    %49 = vector.broadcast %cst_17 : f32 to vector<2x8x128xf32>
    %50 = arith.mulf %49, %48 : vector<2x8x128xf32>
    %cst_18 = arith.constant 0.000000e+00 : f32
    %51 = vector.broadcast %cst_18 : f32 to vector<2x8x128xf32>
    %52 = arith.maximumf %50, %51 : vector<2x8x128xf32>
    %cst_19 = arith.constant 0.000000e+00 : f32
    %53 = vector.broadcast %cst_19 : f32 to vector<2x8x128xf32>
    %54 = arith.cmpf ogt, %52, %53 : vector<2x8x128xf32>
    %cst_20 = arith.constant 1.000000e-30 : f32
    %55 = vector.broadcast %cst_20 : f32 to vector<2x8x128xf32>
    %56 = arith.maximumf %52, %55 : vector<2x8x128xf32>
    %57 = math.log %56 : vector<2x8x128xf32>
    %cst_21 = arith.constant 1.800000e+00 : f32
    %58 = vector.broadcast %cst_21 : f32 to vector<2x8x128xf32>
    %59 = arith.mulf %58, %57 : vector<2x8x128xf32>
    %60 = math.exp %59 : vector<2x8x128xf32>
    %cst_22 = arith.constant 0.000000e+00 : f32
    %61 = vector.broadcast %cst_22 : f32 to vector<2x8x128xf32>
    %62 = arith.select %54, %60, %61 : vector<2x8x128xi1>, vector<2x8x128xf32>
    %cst_23 = arith.constant 1.500000e-01 : f32
    %63 = vector.broadcast %cst_23 : f32 to vector<2x8x128xf32>
    %64 = arith.cmpf olt, %62, %63 : vector<2x8x128xf32>
    %cst_24 = arith.constant 0.000000e+00 : f32
    %65 = vector.broadcast %cst_24 : f32 to vector<2x8x128xf32>
    %66 = arith.select %64, %65, %62 : vector<2x8x128xi1>, vector<2x8x128xf32>
    %c0_25 = arith.constant 0 : index
    %c0_26 = arith.constant 0 : index
    %c0_27 = arith.constant 0 : index
    %c0_28 = arith.constant 0 : index
    %67 = vector.load %arg6[%c0_25, %c0_26, %c0_27, %c0_28] : memref<1x2x8x128xf32, #tpu.memory_space<vmem>>, vector<1x1x8x128xf32>
    %68 = vector.shape_cast %67 : vector<1x1x8x128xf32> to vector<8x128xf32>
    %69 = vector.extract_strided_slice %66 {offsets = [0, 0, 0], sizes = [1, 8, 128], strides = [1, 1, 1]} : vector<2x8x128xf32> to vector<1x8x128xf32>
    %70 = vector.shape_cast %69 : vector<1x8x128xf32> to vector<8x128xf32>
    %71 = vector.shape_cast %70 : vector<8x128xf32> to vector<1x8x128xf32>
    %cst_29 = arith.constant dense<0.000000e+00> : vector<8x128xf32>
    %72 = vector.multi_reduction <add>, %71, %cst_29 [0] : vector<1x8x128xf32> to vector<8x128xf32>
    %73 = arith.addf %68, %72 : vector<8x128xf32>
    %c0_30 = arith.constant 0 : index
    %c0_31 = arith.constant 0 : index
    %c0_32 = arith.constant 0 : index
    %c0_33 = arith.constant 0 : index
    %74 = vector.load %arg6[%c0_30, %c0_31, %c0_32, %c0_33] : memref<1x2x8x128xf32, #tpu.memory_space<vmem>>, vector<1x1x8x128xf32>
    %75 = vector.shape_cast %74 : vector<1x1x8x128xf32> to vector<8x128xf32>
    %76 = vector.shape_cast %73 : vector<8x128xf32> to vector<1x1x8x128xf32>
    tpu.vector_store %arg6[%c0_30, %c0_31, %c0_32, %c0_33], %76 {strides = array<i32>} : memref<1x2x8x128xf32, #tpu.memory_space<vmem>>, vector<1x1x8x128xf32>,
    %c0_34 = arith.constant 0 : index
    %c1 = arith.constant 1 : index
    %c0_35 = arith.constant 0 : index
    %c0_36 = arith.constant 0 : index
    %77 = vector.load %arg6[%c0_34, %c1, %c0_35, %c0_36] : memref<1x2x8x128xf32, #tpu.memory_space<vmem>>, vector<1x1x8x128xf32>
    %78 = vector.shape_cast %77 : vector<1x1x8x128xf32> to vector<8x128xf32>
    %79 = vector.extract_strided_slice %66 {offsets = [1, 0, 0], sizes = [1, 8, 128], strides = [1, 1, 1]} : vector<2x8x128xf32> to vector<1x8x128xf32>
    %80 = vector.shape_cast %79 : vector<1x8x128xf32> to vector<8x128xf32>
    %81 = vector.shape_cast %80 : vector<8x128xf32> to vector<1x8x128xf32>
    %cst_37 = arith.constant dense<0.000000e+00> : vector<8x128xf32>
    %82 = vector.multi_reduction <add>, %81, %cst_37 [0] : vector<1x8x128xf32> to vector<8x128xf32>
    %83 = arith.addf %78, %82 : vector<8x128xf32>
    %c0_38 = arith.constant 0 : index
    %c1_39 = arith.constant 1 : index
    %c0_40 = arith.constant 0 : index
    %c0_41 = arith.constant 0 : index
    %84 = vector.load %arg6[%c0_38, %c1_39, %c0_40, %c0_41] : memref<1x2x8x128xf32, #tpu.memory_space<vmem>>, vector<1x1x8x128xf32>
    %85 = vector.shape_cast %84 : vector<1x1x8x128xf32> to vector<8x128xf32>
    %86 = vector.shape_cast %83 : vector<8x128xf32> to vector<1x1x8x128xf32>
    tpu.vector_store %arg6[%c0_38, %c1_39, %c0_40, %c0_41], %86 {strides = array<i32>} : memref<1x2x8x128xf32, #tpu.memory_space<vmem>>, vector<1x1x8x128xf32>,
    %c0_42 = arith.constant 0 : index
    %c0_43 = arith.constant 0 : index
    %c0_44 = arith.constant 0 : index
    %c0_45 = arith.constant 0 : index
    %87 = vector.load %arg4[%c0_42, %c0_43, %c0_44, %c0_45] : memref<1x3x8x128xf32, #tpu.memory_space<vmem>>, vector<1x1x8x128xf32>
    %88 = vector.shape_cast %87 : vector<1x1x8x128xf32> to vector<8x128xf32>
    %89 = vector.extract_strided_slice %62 {offsets = [0, 0, 0], sizes = [1, 8, 128], strides = [1, 1, 1]} : vector<2x8x128xf32> to vector<1x8x128xf32>
    %90 = vector.shape_cast %89 : vector<1x8x128xf32> to vector<8x128xf32>
    %91 = vector.extract_strided_slice %62 {offsets = [0, 0, 0], sizes = [1, 8, 128], strides = [1, 1, 1]} : vector<2x8x128xf32> to vector<1x8x128xf32>
    %92 = vector.shape_cast %91 : vector<1x8x128xf32> to vector<8x128xf32>
    %93 = arith.mulf %90, %92 : vector<8x128xf32>
    %94 = vector.shape_cast %93 : vector<8x128xf32> to vector<1x8x128xf32>
    %cst_46 = arith.constant dense<0.000000e+00> : vector<8x128xf32>
    %95 = vector.multi_reduction <add>, %94, %cst_46 [0] : vector<1x8x128xf32> to vector<8x128xf32>
    %96 = arith.addf %88, %95 : vector<8x128xf32>
    %c0_47 = arith.constant 0 : index
    %c0_48 = arith.constant 0 : index
    %c0_49 = arith.constant 0 : index
    %c0_50 = arith.constant 0 : index
    %97 = vector.load %arg4[%c0_47, %c0_48, %c0_49, %c0_50] : memref<1x3x8x128xf32, #tpu.memory_space<vmem>>, vector<1x1x8x128xf32>
    %98 = vector.shape_cast %97 : vector<1x1x8x128xf32> to vector<8x128xf32>
    %99 = vector.shape_cast %96 : vector<8x128xf32> to vector<1x1x8x128xf32>
    tpu.vector_store %arg4[%c0_47, %c0_48, %c0_49, %c0_50], %99 {strides = array<i32>} : memref<1x3x8x128xf32, #tpu.memory_space<vmem>>, vector<1x1x8x128xf32>,
    %c0_51 = arith.constant 0 : index
    %c1_52 = arith.constant 1 : index
    %c0_53 = arith.constant 0 : index
    %c0_54 = arith.constant 0 : index
    %100 = vector.load %arg4[%c0_51, %c1_52, %c0_53, %c0_54] : memref<1x3x8x128xf32, #tpu.memory_space<vmem>>, vector<1x1x8x128xf32>
    %101 = vector.shape_cast %100 : vector<1x1x8x128xf32> to vector<8x128xf32>
    %102 = vector.extract_strided_slice %62 {offsets = [0, 0, 0], sizes = [1, 8, 128], strides = [1, 1, 1]} : vector<2x8x128xf32> to vector<1x8x128xf32>
    %103 = vector.shape_cast %102 : vector<1x8x128xf32> to vector<8x128xf32>
    %104 = vector.extract_strided_slice %62 {offsets = [1, 0, 0], sizes = [1, 8, 128], strides = [1, 1, 1]} : vector<2x8x128xf32> to vector<1x8x128xf32>
    %105 = vector.shape_cast %104 : vector<1x8x128xf32> to vector<8x128xf32>
    %106 = arith.mulf %103, %105 : vector<8x128xf32>
    %107 = vector.shape_cast %106 : vector<8x128xf32> to vector<1x8x128xf32>
    %cst_55 = arith.constant dense<0.000000e+00> : vector<8x128xf32>
    %108 = vector.multi_reduction <add>, %107, %cst_55 [0] : vector<1x8x128xf32> to vector<8x128xf32>
    %109 = arith.addf %101, %108 : vector<8x128xf32>
    %c0_56 = arith.constant 0 : index
    %c1_57 = arith.constant 1 : index
    %c0_58 = arith.constant 0 : index
    %c0_59 = arith.constant 0 : index
    %110 = vector.load %arg4[%c0_56, %c1_57, %c0_58, %c0_59] : memref<1x3x8x128xf32, #tpu.memory_space<vmem>>, vector<1x1x8x128xf32>
    %111 = vector.shape_cast %110 : vector<1x1x8x128xf32> to vector<8x128xf32>
    %112 = vector.shape_cast %109 : vector<8x128xf32> to vector<1x1x8x128xf32>
    tpu.vector_store %arg4[%c0_56, %c1_57, %c0_58, %c0_59], %112 {strides = array<i32>} : memref<1x3x8x128xf32, #tpu.memory_space<vmem>>, vector<1x1x8x128xf32>,
    %c0_60 = arith.constant 0 : index
    %c2 = arith.constant 2 : index
    %c0_61 = arith.constant 0 : index
    %c0_62 = arith.constant 0 : index
    %113 = vector.load %arg4[%c0_60, %c2, %c0_61, %c0_62] : memref<1x3x8x128xf32, #tpu.memory_space<vmem>>, vector<1x1x8x128xf32>
    %114 = vector.shape_cast %113 : vector<1x1x8x128xf32> to vector<8x128xf32>
    %115 = vector.extract_strided_slice %62 {offsets = [1, 0, 0], sizes = [1, 8, 128], strides = [1, 1, 1]} : vector<2x8x128xf32> to vector<1x8x128xf32>
    %116 = vector.shape_cast %115 : vector<1x8x128xf32> to vector<8x128xf32>
    %117 = vector.extract_strided_slice %62 {offsets = [1, 0, 0], sizes = [1, 8, 128], strides = [1, 1, 1]} : vector<2x8x128xf32> to vector<1x8x128xf32>
    %118 = vector.shape_cast %117 : vector<1x8x128xf32> to vector<8x128xf32>
    %119 = arith.mulf %116, %118 : vector<8x128xf32>
    %120 = vector.shape_cast %119 : vector<8x128xf32> to vector<1x8x128xf32>
    %cst_63 = arith.constant dense<0.000000e+00> : vector<8x128xf32>
    %121 = vector.multi_reduction <add>, %120, %cst_63 [0] : vector<1x8x128xf32> to vector<8x128xf32>
    %122 = arith.addf %114, %121 : vector<8x128xf32>
    %c0_64 = arith.constant 0 : index
    %c2_65 = arith.constant 2 : index
    %c0_66 = arith.constant 0 : index
    %c0_67 = arith.constant 0 : index
    %123 = vector.load %arg4[%c0_64, %c2_65, %c0_66, %c0_67] : memref<1x3x8x128xf32, #tpu.memory_space<vmem>>, vector<1x1x8x128xf32>
    %124 = vector.shape_cast %123 : vector<1x1x8x128xf32> to vector<8x128xf32>
    %125 = vector.shape_cast %122 : vector<8x128xf32> to vector<1x1x8x128xf32>
    tpu.vector_store %arg4[%c0_64, %c2_65, %c0_66, %c0_67], %125 {strides = array<i32>} : memref<1x3x8x128xf32, #tpu.memory_space<vmem>>, vector<1x1x8x128xf32>,
    %c0_68 = arith.constant 0 : index
    %c0_69 = arith.constant 0 : index
    %c0_70 = arith.constant 0 : index
    %c0_71 = arith.constant 0 : index
    %126 = vector.load %arg3[%c0_68, %c0_69, %c0_70, %c0_71] : memref<2x3x8x128xf32, #tpu.memory_space<vmem>>, vector<2x3x8x128xf32>
    %127 = vector.extract_strided_slice %126 {offsets = [0, 0, 0, 0], sizes = [2, 1, 8, 128], strides = [1, 1, 1, 1]} : vector<2x3x8x128xf32> to vector<2x1x8x128xf32>
    %128 = vector.shape_cast %127 : vector<2x1x8x128xf32> to vector<2x8x128xf32>
    %129 = vector.extract_strided_slice %126 {offsets = [0, 1, 0, 0], sizes = [2, 1, 8, 128], strides = [1, 1, 1, 1]} : vector<2x3x8x128xf32> to vector<2x1x8x128xf32>
    %130 = vector.shape_cast %129 : vector<2x1x8x128xf32> to vector<2x8x128xf32>
    %131 = vector.extract_strided_slice %126 {offsets = [0, 2, 0, 0], sizes = [2, 1, 8, 128], strides = [1, 1, 1, 1]} : vector<2x3x8x128xf32> to vector<2x1x8x128xf32>
    %132 = vector.shape_cast %131 : vector<2x1x8x128xf32> to vector<2x8x128xf32>
    %cst_72 = arith.constant 9.99999997E-7 : f32
    %133 = vector.broadcast %cst_72 : f32 to vector<2x8x128xf32>
    %134 = arith.maximumf %128, %133 : vector<2x8x128xf32>
    %135 = math.log %134 : vector<2x8x128xf32>
    %cst_73 = arith.constant -0.556115866 : f32
    %136 = vector.broadcast %cst_73 : f32 to vector<2x8x128xf32>
    %137 = arith.mulf %135, %136 : vector<2x8x128xf32>
    %cst_74 = arith.constant 9.99999997E-7 : f32
    %138 = vector.broadcast %cst_74 : f32 to vector<2x8x128xf32>
    %139 = arith.maximumf %130, %138 : vector<2x8x128xf32>
    %140 = math.log %139 : vector<2x8x128xf32>
    %cst_75 = arith.constant -0.135521799 : f32
    %141 = vector.broadcast %cst_75 : f32 to vector<2x8x128xf32>
    %142 = arith.mulf %140, %141 : vector<2x8x128xf32>
    %143 = arith.addf %137, %142 : vector<2x8x128xf32>
    %cst_76 = arith.constant 9.99999997E-7 : f32
    %144 = vector.broadcast %cst_76 : f32 to vector<2x8x128xf32>
    %145 = arith.maximumf %132, %144 : vector<2x8x128xf32>
    %146 = math.log %145 : vector<2x8x128xf32>
    %cst_77 = arith.constant 1.57358813 : f32
    %147 = vector.broadcast %cst_77 : f32 to vector<2x8x128xf32>
    %148 = arith.mulf %146, %147 : vector<2x8x128xf32>
    %149 = arith.addf %143, %148 : vector<2x8x128xf32>
    %cst_78 = arith.constant 0.000000e+00 : f32
    %150 = vector.broadcast %cst_78 : f32 to vector<2x8x128xf32>
    %151 = arith.minimumf %149, %150 : vector<2x8x128xf32>
    %cst_79 = arith.constant 2.700000e-01 : f32
    %152 = vector.broadcast %cst_79 : f32 to vector<2x8x128xf32>
    %153 = arith.mulf %151, %152 : vector<2x8x128xf32>
    %154 = math.exp %153 : vector<2x8x128xf32>
    %cst_80 = arith.constant 2.125000e-01 : f32
    %155 = vector.broadcast %cst_80 : f32 to vector<2x8x128xf32>
    %156 = arith.mulf %154, %155 : vector<2x8x128xf32>
    %cst_81 = arith.constant 5.700000e-01 : f32
    %157 = vector.broadcast %cst_81 : f32 to vector<2x8x128xf32>
    %158 = arith.mulf %151, %157 : vector<2x8x128xf32>
    %159 = math.exp %158 : vector<2x8x128xf32>
    %cst_82 = arith.constant 7.154000e-01 : f32
    %160 = vector.broadcast %cst_82 : f32 to vector<2x8x128xf32>
    %161 = arith.mulf %159, %160 : vector<2x8x128xf32>
    %162 = arith.addf %156, %161 : vector<2x8x128xf32>
    %cst_83 = arith.constant 7.800000e-01 : f32
    %163 = vector.broadcast %cst_83 : f32 to vector<2x8x128xf32>
    %164 = arith.mulf %151, %163 : vector<2x8x128xf32>
    %165 = math.exp %164 : vector<2x8x128xf32>
    %cst_84 = arith.constant 7.210000e-02 : f32
    %166 = vector.broadcast %cst_84 : f32 to vector<2x8x128xf32>
    %167 = arith.mulf %165, %166 : vector<2x8x128xf32>
    %168 = arith.addf %162, %167 : vector<2x8x128xf32>
    %cst_85 = arith.constant 0.0180755276 : f32
    %169 = vector.broadcast %cst_85 : f32 to vector<2x8x128xf32>
    %170 = arith.addf %168, %169 : vector<2x8x128xf32>
    %171 = math.log %170 : vector<2x8x128xf32>
    %cst_86 = arith.constant -0.434294492 : f32
    %172 = vector.broadcast %cst_86 : f32 to vector<2x8x128xf32>
    %173 = arith.mulf %172, %171 : vector<2x8x128xf32>
    %cst_87 = arith.constant 0.000000e+00 : f32
    %174 = vector.broadcast %cst_87 : f32 to vector<2x8x128xf32>
    %175 = arith.maximumf %173, %174 : vector<2x8x128xf32>
    %cst_88 = arith.constant 0.000000e+00 : f32
    %176 = vector.broadcast %cst_88 : f32 to vector<2x8x128xf32>
    %177 = arith.cmpf ogt, %175, %176 : vector<2x8x128xf32>
    %cst_89 = arith.constant 1.000000e-30 : f32
    %178 = vector.broadcast %cst_89 : f32 to vector<2x8x128xf32>
    %179 = arith.maximumf %175, %178 : vector<2x8x128xf32>
    %180 = math.log %179 : vector<2x8x128xf32>
    %cst_90 = arith.constant 1.800000e+00 : f32
    %181 = vector.broadcast %cst_90 : f32 to vector<2x8x128xf32>
    %182 = arith.mulf %181, %180 : vector<2x8x128xf32>
    %183 = math.exp %182 : vector<2x8x128xf32>
    %cst_91 = arith.constant 0.000000e+00 : f32
    %184 = vector.broadcast %cst_91 : f32 to vector<2x8x128xf32>
    %185 = arith.select %177, %183, %184 : vector<2x8x128xi1>, vector<2x8x128xf32>
    %cst_92 = arith.constant 1.500000e-01 : f32
    %186 = vector.broadcast %cst_92 : f32 to vector<2x8x128xf32>
    %187 = arith.cmpf olt, %185, %186 : vector<2x8x128xf32>
    %cst_93 = arith.constant 0.000000e+00 : f32
    %188 = vector.broadcast %cst_93 : f32 to vector<2x8x128xf32>
    %189 = arith.select %187, %188, %185 : vector<2x8x128xi1>, vector<2x8x128xf32>
    %c0_94 = arith.constant 0 : index
    %c0_95 = arith.constant 0 : index
    %c0_96 = arith.constant 0 : index
    %c0_97 = arith.constant 0 : index
    %190 = vector.load %arg7[%c0_94, %c0_95, %c0_96, %c0_97] : memref<1x2x8x128xf32, #tpu.memory_space<vmem>>, vector<1x1x8x128xf32>
    %191 = vector.shape_cast %190 : vector<1x1x8x128xf32> to vector<8x128xf32>
    %192 = vector.extract_strided_slice %189 {offsets = [0, 0, 0], sizes = [1, 8, 128], strides = [1, 1, 1]} : vector<2x8x128xf32> to vector<1x8x128xf32>
    %193 = vector.shape_cast %192 : vector<1x8x128xf32> to vector<8x128xf32>
    %194 = vector.shape_cast %193 : vector<8x128xf32> to vector<1x8x128xf32>
    %cst_98 = arith.constant dense<0.000000e+00> : vector<8x128xf32>
    %195 = vector.multi_reduction <add>, %194, %cst_98 [0] : vector<1x8x128xf32> to vector<8x128xf32>
    %196 = arith.addf %191, %195 : vector<8x128xf32>
    %c0_99 = arith.constant 0 : index
    %c0_100 = arith.constant 0 : index
    %c0_101 = arith.constant 0 : index
    %c0_102 = arith.constant 0 : index
    %197 = vector.load %arg7[%c0_99, %c0_100, %c0_101, %c0_102] : memref<1x2x8x128xf32, #tpu.memory_space<vmem>>, vector<1x1x8x128xf32>
    %198 = vector.shape_cast %197 : vector<1x1x8x128xf32> to vector<8x128xf32>
    %199 = vector.shape_cast %196 : vector<8x128xf32> to vector<1x1x8x128xf32>
    tpu.vector_store %arg7[%c0_99, %c0_100, %c0_101, %c0_102], %199 {strides = array<i32>} : memref<1x2x8x128xf32, #tpu.memory_space<vmem>>, vector<1x1x8x128xf32>,
    %c0_103 = arith.constant 0 : index
    %c1_104 = arith.constant 1 : index
    %c0_105 = arith.constant 0 : index
    %c0_106 = arith.constant 0 : index
    %200 = vector.load %arg7[%c0_103, %c1_104, %c0_105, %c0_106] : memref<1x2x8x128xf32, #tpu.memory_space<vmem>>, vector<1x1x8x128xf32>
    %201 = vector.shape_cast %200 : vector<1x1x8x128xf32> to vector<8x128xf32>
    %202 = vector.extract_strided_slice %189 {offsets = [1, 0, 0], sizes = [1, 8, 128], strides = [1, 1, 1]} : vector<2x8x128xf32> to vector<1x8x128xf32>
    %203 = vector.shape_cast %202 : vector<1x8x128xf32> to vector<8x128xf32>
    %204 = vector.shape_cast %203 : vector<8x128xf32> to vector<1x8x128xf32>
    %cst_107 = arith.constant dense<0.000000e+00> : vector<8x128xf32>
    %205 = vector.multi_reduction <add>, %204, %cst_107 [0] : vector<1x8x128xf32> to vector<8x128xf32>
    %206 = arith.addf %201, %205 : vector<8x128xf32>
    %c0_108 = arith.constant 0 : index
    %c1_109 = arith.constant 1 : index
    %c0_110 = arith.constant 0 : index
    %c0_111 = arith.constant 0 : index
    %207 = vector.load %arg7[%c0_108, %c1_109, %c0_110, %c0_111] : memref<1x2x8x128xf32, #tpu.memory_space<vmem>>, vector<1x1x8x128xf32>
    %208 = vector.shape_cast %207 : vector<1x1x8x128xf32> to vector<8x128xf32>
    %209 = vector.shape_cast %206 : vector<8x128xf32> to vector<1x1x8x128xf32>
    tpu.vector_store %arg7[%c0_108, %c1_109, %c0_110, %c0_111], %209 {strides = array<i32>} : memref<1x2x8x128xf32, #tpu.memory_space<vmem>>, vector<1x1x8x128xf32>,
    %c0_112 = arith.constant 0 : index
    %c0_113 = arith.constant 0 : index
    %c0_114 = arith.constant 0 : index
    %c0_115 = arith.constant 0 : index
    %210 = vector.load %arg5[%c0_112, %c0_113, %c0_114, %c0_115] : memref<1x3x8x128xf32, #tpu.memory_space<vmem>>, vector<1x1x8x128xf32>
    %211 = vector.shape_cast %210 : vector<1x1x8x128xf32> to vector<8x128xf32>
    %212 = vector.extract_strided_slice %185 {offsets = [0, 0, 0], sizes = [1, 8, 128], strides = [1, 1, 1]} : vector<2x8x128xf32> to vector<1x8x128xf32>
    %213 = vector.shape_cast %212 : vector<1x8x128xf32> to vector<8x128xf32>
    %214 = vector.extract_strided_slice %185 {offsets = [0, 0, 0], sizes = [1, 8, 128], strides = [1, 1, 1]} : vector<2x8x128xf32> to vector<1x8x128xf32>
    %215 = vector.shape_cast %214 : vector<1x8x128xf32> to vector<8x128xf32>
    %216 = arith.mulf %213, %215 : vector<8x128xf32>
    %217 = vector.shape_cast %216 : vector<8x128xf32> to vector<1x8x128xf32>
    %cst_116 = arith.constant dense<0.000000e+00> : vector<8x128xf32>
    %218 = vector.multi_reduction <add>, %217, %cst_116 [0] : vector<1x8x128xf32> to vector<8x128xf32>
    %219 = arith.addf %211, %218 : vector<8x128xf32>
    %c0_117 = arith.constant 0 : index
    %c0_118 = arith.constant 0 : index
    %c0_119 = arith.constant 0 : index
    %c0_120 = arith.constant 0 : index
    %220 = vector.load %arg5[%c0_117, %c0_118, %c0_119, %c0_120] : memref<1x3x8x128xf32, #tpu.memory_space<vmem>>, vector<1x1x8x128xf32>
    %221 = vector.shape_cast %220 : vector<1x1x8x128xf32> to vector<8x128xf32>
    %222 = vector.shape_cast %219 : vector<8x128xf32> to vector<1x1x8x128xf32>
    tpu.vector_store %arg5[%c0_117, %c0_118, %c0_119, %c0_120], %222 {strides = array<i32>} : memref<1x3x8x128xf32, #tpu.memory_space<vmem>>, vector<1x1x8x128xf32>,
    %c0_121 = arith.constant 0 : index
    %c1_122 = arith.constant 1 : index
    %c0_123 = arith.constant 0 : index
    %c0_124 = arith.constant 0 : index
    %223 = vector.load %arg5[%c0_121, %c1_122, %c0_123, %c0_124] : memref<1x3x8x128xf32, #tpu.memory_space<vmem>>, vector<1x1x8x128xf32>
    %224 = vector.shape_cast %223 : vector<1x1x8x128xf32> to vector<8x128xf32>
    %225 = vector.extract_strided_slice %185 {offsets = [0, 0, 0], sizes = [1, 8, 128], strides = [1, 1, 1]} : vector<2x8x128xf32> to vector<1x8x128xf32>
    %226 = vector.shape_cast %225 : vector<1x8x128xf32> to vector<8x128xf32>
    %227 = vector.extract_strided_slice %185 {offsets = [1, 0, 0], sizes = [1, 8, 128], strides = [1, 1, 1]} : vector<2x8x128xf32> to vector<1x8x128xf32>
    %228 = vector.shape_cast %227 : vector<1x8x128xf32> to vector<8x128xf32>
    %229 = arith.mulf %226, %228 : vector<8x128xf32>
    %230 = vector.shape_cast %229 : vector<8x128xf32> to vector<1x8x128xf32>
    %cst_125 = arith.constant dense<0.000000e+00> : vector<8x128xf32>
    %231 = vector.multi_reduction <add>, %230, %cst_125 [0] : vector<1x8x128xf32> to vector<8x128xf32>
    %232 = arith.addf %224, %231 : vector<8x128xf32>
    %c0_126 = arith.constant 0 : index
    %c1_127 = arith.constant 1 : index
    %c0_128 = arith.constant 0 : index
    %c0_129 = arith.constant 0 : index
    %233 = vector.load %arg5[%c0_126, %c1_127, %c0_128, %c0_129] : memref<1x3x8x128xf32, #tpu.memory_space<vmem>>, vector<1x1x8x128xf32>
    %234 = vector.shape_cast %233 : vector<1x1x8x128xf32> to vector<8x128xf32>
    %235 = vector.shape_cast %232 : vector<8x128xf32> to vector<1x1x8x128xf32>
    tpu.vector_store %arg5[%c0_126, %c1_127, %c0_128, %c0_129], %235 {strides = array<i32>} : memref<1x3x8x128xf32, #tpu.memory_space<vmem>>, vector<1x1x8x128xf32>,
    %c0_130 = arith.constant 0 : index
    %c2_131 = arith.constant 2 : index
    %c0_132 = arith.constant 0 : index
    %c0_133 = arith.constant 0 : index
    %236 = vector.load %arg5[%c0_130, %c2_131, %c0_132, %c0_133] : memref<1x3x8x128xf32, #tpu.memory_space<vmem>>, vector<1x1x8x128xf32>
    %237 = vector.shape_cast %236 : vector<1x1x8x128xf32> to vector<8x128xf32>
    %238 = vector.extract_strided_slice %185 {offsets = [1, 0, 0], sizes = [1, 8, 128], strides = [1, 1, 1]} : vector<2x8x128xf32> to vector<1x8x128xf32>
    %239 = vector.shape_cast %238 : vector<1x8x128xf32> to vector<8x128xf32>
    %240 = vector.extract_strided_slice %185 {offsets = [1, 0, 0], sizes = [1, 8, 128], strides = [1, 1, 1]} : vector<2x8x128xf32> to vector<1x8x128xf32>
    %241 = vector.shape_cast %240 : vector<1x8x128xf32> to vector<8x128xf32>
    %242 = arith.mulf %239, %241 : vector<8x128xf32>
    %243 = vector.shape_cast %242 : vector<8x128xf32> to vector<1x8x128xf32>
    %cst_134 = arith.constant dense<0.000000e+00> : vector<8x128xf32>
    %244 = vector.multi_reduction <add>, %243, %cst_134 [0] : vector<1x8x128xf32> to vector<8x128xf32>
    %245 = arith.addf %237, %244 : vector<8x128xf32>
    %c0_135 = arith.constant 0 : index
    %c2_136 = arith.constant 2 : index
    %c0_137 = arith.constant 0 : index
    %c0_138 = arith.constant 0 : index
    %246 = vector.load %arg5[%c0_135, %c2_136, %c0_137, %c0_138] : memref<1x3x8x128xf32, #tpu.memory_space<vmem>>, vector<1x1x8x128xf32>
    %247 = vector.shape_cast %246 : vector<1x1x8x128xf32> to vector<8x128xf32>
    %248 = vector.shape_cast %245 : vector<8x128xf32> to vector<1x1x8x128xf32>
    tpu.vector_store %arg5[%c0_135, %c2_136, %c0_137, %c0_138], %248 {strides = array<i32>} : memref<1x3x8x128xf32, #tpu.memory_space<vmem>>, vector<1x1x8x128xf32>,
    return
  }
  func.func @transform_0(%arg0: i32, %arg1: i32) -> (i32, i32, i32, i32) {
    %c1_i32 = arith.constant 1 : i32
    %0 = arith.muli %arg0, %c1_i32 : i32
    %1 = arith.addi %0, %arg1 : i32
    %c0_i32 = arith.constant 0 : i32
    %c0_i32_0 = arith.constant 0 : i32
    %c0_i32_1 = arith.constant 0 : i32
    %c0_i32_2 = arith.constant 0 : i32
    return %c0_i32, %c0_i32_0, %1, %c0_i32_1 : i32, i32, i32, i32
  }
  func.func @transform_1(%arg0: i32, %arg1: i32) -> (i32, i32, i32, i32) {
    %c1_i32 = arith.constant 1 : i32
    %0 = arith.muli %arg0, %c1_i32 : i32
    %1 = arith.addi %0, %arg1 : i32
    %c0_i32 = arith.constant 0 : i32
    %c0_i32_0 = arith.constant 0 : i32
    %c0_i32_1 = arith.constant 0 : i32
    %c0_i32_2 = arith.constant 0 : i32
    return %c0_i32, %c0_i32_0, %1, %c0_i32_1 : i32, i32, i32, i32
  }
  func.func @transform_2(%arg0: i32, %arg1: i32) -> (i32, i32, i32, i32) {
    %c0_i32 = arith.constant 0 : i32
    %c0_i32_0 = arith.constant 0 : i32
    %c0_i32_1 = arith.constant 0 : i32
    %c0_i32_2 = arith.constant 0 : i32
    return %arg0, %c0_i32, %c0_i32_0, %c0_i32_1 : i32, i32, i32, i32
  }
  func.func @transform_3(%arg0: i32, %arg1: i32) -> (i32, i32, i32, i32) {
    %c0_i32 = arith.constant 0 : i32
    %c0_i32_0 = arith.constant 0 : i32
    %c0_i32_1 = arith.constant 0 : i32
    %c0_i32_2 = arith.constant 0 : i32
    return %arg0, %c0_i32, %c0_i32_0, %c0_i32_1 : i32, i32, i32, i32
  }
  func.func @transform_4(%arg0: i32, %arg1: i32) -> (i32, i32, i32, i32) {
    %c0_i32 = arith.constant 0 : i32
    %c0_i32_0 = arith.constant 0 : i32
    %c0_i32_1 = arith.constant 0 : i32
    %c0_i32_2 = arith.constant 0 : i32
    return %arg0, %c0_i32, %c0_i32_0, %c0_i32_1 : i32, i32, i32, i32
  }
  func.func @transform_5(%arg0: i32, %arg1: i32) -> (i32, i32, i32, i32) {
    %c0_i32 = arith.constant 0 : i32
    %c0_i32_0 = arith.constant 0 : i32
    %c0_i32_1 = arith.constant 0 : i32
    %c0_i32_2 = arith.constant 0 : i32
    return %arg0, %c0_i32, %c0_i32_0, %c0_i32_1 : i32, i32, i32, i32
  }
}

</mosaic_0001>

<llo_original>
// kernel: tpu_custom_call.1
$region0: #{tpu_custom_call.1}
  #allocation0 [shape = 'u32[]', space=smem, size = 0x4, offset = 0x4, fixed_abs, tag = 'smem constant byte address 0x4 - core index']
  #allocation1 [shape = 'u32[144,128]{1,0:T(1,128)}', space=vmem, size = 0x12000, scoped, tag = 'internal scratch']
  %s0 = inlined_call_operand.hbm [shape: f32[2,3,16,128], index: 0, kind: input, shape index: {}]
  %s1 = inlined_call_operand.hbm [shape: f32[2,3,16,128], index: 1, kind: input, shape index: {}]
  %s2 = inlined_call_operand.hbm [shape: f32[2,3,8,128], index: 2, kind: output, shape index: {0}]
  %s3 = inlined_call_operand.hbm [shape: f32[2,3,8,128], index: 3, kind: output, shape index: {1}]
  %s4 = inlined_call_operand.hbm [shape: f32[2,2,8,128], index: 4, kind: output, shape index: {2}]
  %s5 = inlined_call_operand.hbm [shape: f32[2,2,8,128], index: 5, kind: output, shape index: {3}]
  %6 = xla_tuple %s2, %s3, %s4, %s5
  %s7 = sld [smem:[#allocation0]]
  $region77: #{tpu_custom_call.1} parent=0
    _
  %s9 = ssub.s32 1, %s7
  %s10 = scalar_select 0, %s9, %s7
  $region1: #{tpu_custom_call.1} parent=0
    #allocation2 [shape = 'u8[49152]{0}', space=vmem, size = 0xc000, scoped, tag = 'input window, operand 0']
    #allocation3 [shape = 's32[2]{0}', space=sflag, size = 0x8, scoped, tag = 'scoped memory for tpu_custom_call.1']
    #allocation4 [shape = 's32[2]{0}', space=sflag, size = 0x8, scoped, tag = 'scoped memory for tpu_custom_call.1']
    #allocation5 [shape = 'u8[49152]{0}', space=vmem, size = 0xc000, scoped, tag = 'input window, operand 1']
    #allocation6 [shape = 's32[2]{0}', space=sflag, size = 0x8, scoped, tag = 'scoped memory for tpu_custom_call.1']
    #allocation7 [shape = 'u8[24576]{0}', space=vmem, size = 0x6000, scoped, tag = 'output window, operand 0']
    #allocation8 [shape = 'u8[24576]{0}', space=vmem, size = 0x6000, scoped, tag = 'output window, operand 1']
    #allocation9 [shape = 's32[2]{0}', space=sflag, size = 0x8, scoped, tag = 'scoped memory for tpu_custom_call.1']
    #allocation10 [shape = 'u8[16384]{0}', space=vmem, size = 0x4000, scoped, tag = 'output window, operand 2']
    #allocation11 [shape = 'u8[16384]{0}', space=vmem, size = 0x4000, scoped, tag = 'output window, operand 3']
    #allocation12 [shape = 's32[2]{0}', space=sflag, size = 0x8, scoped, tag = 'scoped memory for tpu_custom_call.1']
    %11 = vsyncpa [#allocation3], 0
    %s12 = scalar_lea.sflag [#allocation3], 1
    %13 = vsyncpa %s12, 0
    %14 = vsyncpa [#allocation6], 0
    %s15 = scalar_lea.sflag [#allocation6], 1
    %16 = vsyncpa %s15, 0
    %17 = vsyncpa [#allocation4], 0
    %s18 = scalar_lea.sflag [#allocation4], 1
    %19 = vsyncpa %s18, 0
    %20 = vsyncpa [#allocation9], 0
    %s21 = scalar_lea.sflag [#allocation9], 1
    %22 = vsyncpa %s21, 0
    %23 = vsyncpa [#allocation12], 0
    %s24 = scalar_lea.sflag [#allocation12], 1
    %25 = vsyncpa %s24, 0
    loop: start=0, step=1, limit=4
    $region2: #{tpu_custom_call.1} parent=1 // loop_pre_header
      _
    $region3: #{tpu_custom_call.1} parent=1 // loop_header
      %s27 = sphi 0, %s31
      %p28 = scmp.ge.s32.totalorder %s27, 4
      %s34 = sphi 0, %s46
      %s35 = sphi 0, %s42
      %s36 = sphi 0, %s34
      %s37 = sphi 0, %s35
      %s38 = sphi 0, %s36
      %s39 = sphi 0, %s37
      %s51 = sphi 0, %s53
      %s54 = sphi 0, %s51
      %s55 = sphi 0, %s54
      %s71 = sphi 0, %s55
      %s79 = sphi 0, %s81
      %s82 = sphi 0, %s79
      %s83 = sphi 0, %s82
      %s99 = sphi 0, %s83
      %s105 = sphi 0, %s107
      %s108 = sphi 0, %s105
      %s109 = sphi 0, %s108
      %s125 = sphi 0, %s109
      %s131 = sphi 0, %s133
      %s134 = sphi 0, %s131
      %s135 = sphi 0, %s134
      %s151 = sphi 0, %s135
      %s157 = sphi 0, %s159
      %s160 = sphi 0, %s157
      %s161 = sphi 0, %s160
      %s177 = sphi 0, %s161
      %s183 = sphi 0, %s185
      %s186 = sphi 0, %s183
      %s187 = sphi 0, %s186
      %s203 = sphi 0, %s187
    $region4: #{tpu_custom_call.1} parent=1 // loop_header_branch
      %30 = sbr.rel (%p28) target = $region8
    $region5: #{tpu_custom_call.1} parent=1 // loop_body
      %s32 = ssub.s32 %s27, 1
      %s33 = ssub.s32 %s27, 2
      %s40 = sadd.s32 1, %s35
      %p41 = scmp.ge.s32.totalorder %s40, 1
      %s42 = scalar_select %p41, 0, %s40
      %s43 = sadd.s32 1, %s34
      %s44 = scalar_select %p41, %s43, %s34
      %p45 = scmp.ge.s32.totalorder %s44, 2
      %s46 = scalar_select %p45, 0, %s44
      %s47 = sadd.s32 %s34, %s35
      %s48 = sadd.s32 %s46, %s42
      %s49 = ssub.s32 %s47, %s48
      %p50 = scmp.eq.s32.totalorder %s49, 0
      %s52 = sadd.s32 %s51, 1
      %s53 = scalar_select %p50, %s51, %s52
      %p56 = pneg %p50
      %p57 = scmp.eq.s32.totalorder %s27, 1
      %p58 = por %p56, %p57
      %p59 = scmp.ne.s32.totalorder %s51, %s54
      %p60 = scmp.eq.s32.totalorder %s27, 0
      %p61 = por %p59, %p60
      %p62 = scmp.ne.s32.totalorder %s51, %s54
      %p63 = scmp.eq.s32.totalorder %s32, 1
      %p64 = por %p62, %p63
      %p65 = scmp.ne.s32.totalorder %s54, %s55
      %p66 = scmp.eq.s32.totalorder %s32, 0
      %p67 = por %p65, %p66
      %p68 = scmp.ne.s32.totalorder %s54, %s55
      %p69 = scmp.eq.s32.totalorder %s33, 1
      %p70 = por %p68, %p69
      %p72 = scmp.ne.s32.totalorder %s55, %s71
      %p73 = scmp.eq.s32.totalorder %s33, 0
      %p74 = por %p72, %p73
      %s75 = sadd.s32 %s34, %s35
      %s76 = sadd.s32 %s46, %s42
      %s77 = ssub.s32 %s75, %s76
      %p78 = scmp.eq.s32.totalorder %s77, 0
      %s80 = sadd.s32 %s79, 1
      %s81 = scalar_select %p78, %s79, %s80
      %p84 = pneg %p78
      %p85 = scmp.eq.s32.totalorder %s27, 1
      %p86 = por %p84, %p85
      %p87 = scmp.ne.s32.totalorder %s79, %s82
      %p88 = scmp.eq.s32.totalorder %s27, 0
      %p89 = por %p87, %p88
      %p90 = scmp.ne.s32.totalorder %s79, %s82
      %p91 = scmp.eq.s32.totalorder %s32, 1
      %p92 = por %p90, %p91
      %p93 = scmp.ne.s32.totalorder %s82, %s83
      %p94 = scmp.eq.s32.totalorder %s32, 0
      %p95 = por %p93, %p94
      %p96 = scmp.ne.s32.totalorder %s82, %s83
      %p97 = scmp.eq.s32.totalorder %s33, 1
      %p98 = por %p96, %p97
      %p100 = scmp.ne.s32.totalorder %s83, %s99
      %p101 = scmp.eq.s32.totalorder %s33, 0
      %p102 = por %p100, %p101
      %s103 = ssub.s32 %s34, %s46
      %p104 = scmp.eq.s32.totalorder %s103, 0
      %s106 = sadd.s32 %s105, 1
      %s107 = scalar_select %p104, %s105, %s106
      %p110 = pneg %p104
      %p111 = scmp.eq.s32.totalorder %s27, 1
      %p112 = por %p110, %p111
      %p113 = scmp.ne.s32.totalorder %s105, %s108
      %p114 = scmp.eq.s32.totalorder %s27, 0
      %p115 = por %p113, %p114
      %p116 = scmp.ne.s32.totalorder %s105, %s108
      %p117 = scmp.eq.s32.totalorder %s32, 1
      %p118 = por %p116, %p117
      %p119 = scmp.ne.s32.totalorder %s108, %s109
      %p120 = scmp.eq.s32.totalorder %s32, 0
      %p121 = por %p119, %p120
      %p122 = scmp.ne.s32.totalorder %s108, %s109
      %p123 = scmp.eq.s32.totalorder %s33, 1
      %p124 = por %p122, %p123
      %p126 = scmp.ne.s32.totalorder %s109, %s125
      %p127 = scmp.eq.s32.totalorder %s33, 0
      %p128 = por %p126, %p127
      %s129 = ssub.s32 %s34, %s46
      %p130 = scmp.eq.s32.totalorder %s129, 0
      %s132 = sadd.s32 %s131, 1
      %s133 = scalar_select %p130, %s131, %s132
      %p136 = pneg %p130
      %p137 = scmp.eq.s32.totalorder %s27, 1
      %p138 = por %p136, %p137
      %p139 = scmp.ne.s32.totalorder %s131, %s134
      %p140 = scmp.eq.s32.totalorder %s27, 0
      %p141 = por %p139, %p140
      %p142 = scmp.ne.s32.totalorder %s131, %s134
      %p143 = scmp.eq.s32.totalorder %s32, 1
      %p144 = por %p142, %p143
      %p145 = scmp.ne.s32.totalorder %s134, %s135
      %p146 = scmp.eq.s32.totalorder %s32, 0
      %p147 = por %p145, %p146
      %p148 = scmp.ne.s32.totalorder %s134, %s135
      %p149 = scmp.eq.s32.totalorder %s33, 1
      %p150 = por %p148, %p149
      %p152 = scmp.ne.s32.totalorder %s135, %s151
      %p153 = scmp.eq.s32.totalorder %s33, 0
      %p154 = por %p152, %p153
      %s155 = ssub.s32 %s34, %s46
      %p156 = scmp.eq.s32.totalorder %s155, 0
      %s158 = sadd.s32 %s157, 1
      %s159 = scalar_select %p156, %s157, %s158
      %p162 = pneg %p156
      %p163 = scmp.eq.s32.totalorder %s27, 1
      %p164 = por %p162, %p163
      %p165 = scmp.ne.s32.totalorder %s157, %s160
      %p166 = scmp.eq.s32.totalorder %s27, 0
      %p167 = por %p165, %p166
      %p168 = scmp.ne.s32.totalorder %s157, %s160
      %p169 = scmp.eq.s32.totalorder %s32, 1
      %p170 = por %p168, %p169
      %p171 = scmp.ne.s32.totalorder %s160, %s161
      %p172 = scmp.eq.s32.totalorder %s32, 0
      %p173 = por %p171, %p172
      %p174 = scmp.ne.s32.totalorder %s160, %s161
      %p175 = scmp.eq.s32.totalorder %s33, 1
      %p176 = por %p174, %p175
      %p178 = scmp.ne.s32.totalorder %s161, %s177
      %p179 = scmp.eq.s32.totalorder %s33, 0
      %p180 = por %p178, %p179
      %s181 = ssub.s32 %s34, %s46
      %p182 = scmp.eq.s32.totalorder %s181, 0
      %s184 = sadd.s32 %s183, 1
      %s185 = scalar_select %p182, %s183, %s184
      %p188 = pneg %p182
      %p189 = scmp.eq.s32.totalorder %s27, 1
      %p190 = por %p188, %p189
      %p191 = scmp.ne.s32.totalorder %s183, %s186
      %p192 = scmp.eq.s32.totalorder %s27, 0
      %p193 = por %p191, %p192
      %p194 = scmp.ne.s32.totalorder %s183, %s186
      %p195 = scmp.eq.s32.totalorder %s32, 1
      %p196 = por %p194, %p195
      %p197 = scmp.ne.s32.totalorder %s186, %s187
      %p198 = scmp.eq.s32.totalorder %s32, 0
      %p199 = por %p197, %p198
      %p200 = scmp.ne.s32.totalorder %s186, %s187
      %p201 = scmp.eq.s32.totalorder %s33, 1
      %p202 = por %p200, %p201
      %p204 = scmp.ne.s32.totalorder %s187, %s203
      %p205 = scmp.eq.s32.totalorder %s33, 0
      %p206 = por %p204, %p205
      %p207 = scmp.le.s32.totalorder 1, %s27
      %p208 = scmp.lt.s32.totalorder %s27, 3
      %p209 = pnand %p207, %p208
      %p210 = pneg %p209
      // Predicated region
      $region9: #{tpu_custom_call.1} parent=5 // pred_check
        _
      $region10: #{tpu_custom_call.1} parent=5 // pred_check_branch
        %212 = sbr.rel (%p209) target = $region12
      $region11: #{tpu_custom_call.1} parent=5 // pred_region
        %s213 = ssub.s32 %s27, 1
      $region12: #{tpu_custom_call.1} parent=5 // pred_fallthru
        _
      %p214 = scmp.lt.s32.totalorder %s27, 2
      // Predicated region
      $region13: #{tpu_custom_call.1} parent=5 // pred_check
        %p215 = pneg %p214
      $region14: #{tpu_custom_call.1} parent=5 // pred_check_branch
        %217 = sbr.rel (%p215) target = $region16
      $region15: #{tpu_custom_call.1} parent=5 // pred_region
        // Predicated region
        $region17: #{tpu_custom_call.1} parent=15 // pred_check
          %p218 = pneg %p61
        $region18: #{tpu_custom_call.1} parent=15 // pred_check_branch
          %220 = sbr.rel (%p218) target = $region20
        $region19: #{tpu_custom_call.1} parent=15 // pred_region
          %s221 = sand.u32 %s51, 1
          %s222 = scalar_lea.sflag [#allocation3], %s221
          %s223 = sand.u32 %s51, 1
          %s224 = smul.addr %s223, 48
          %s225 = scalar_lea.vmem [#allocation2], %s224
          %s226 = sadd.s32 %s34, %s35
          %s228 = ssub.s32 768, 768
          %229 = vsyncadd %s222, %s228
          %s230 = smul.addr %s226, 128
          %s231 = scalar_lea.hbm %s0, %s230
          %s232 = sshll.u32 %s225, 4
          %s233 = int_to_ptr.vmem [resolvable:$true] %s232
          %238 = dma.hbm_to_vmem [thread:$0]  %s231, 768, %s233, %s222, 256, 128, 8
        $region20: #{tpu_custom_call.1} parent=15 // pred_fallthru
          _
        // Predicated region
        $region21: #{tpu_custom_call.1} parent=15 // pred_check
          %p239 = pneg %p89
        $region22: #{tpu_custom_call.1} parent=15 // pred_check_branch
          %241 = sbr.rel (%p239) target = $region24
        $region23: #{tpu_custom_call.1} parent=15 // pred_region
          %s242 = sand.u32 %s79, 1
          %s243 = scalar_lea.sflag [#allocation6], %s242
          %s244 = sand.u32 %s79, 1
          %s245 = smul.addr %s244, 48
          %s246 = scalar_lea.vmem [#allocation5], %s245
          %s247 = sadd.s32 %s34, %s35
          %s249 = ssub.s32 768, 768
          %250 = vsyncadd %s243, %s249
          %s251 = smul.addr %s247, 128
          %s252 = scalar_lea.hbm %s1, %s251
          %s253 = sshll.u32 %s246, 4
          %s254 = int_to_ptr.vmem [resolvable:$true] %s253
          %259 = dma.hbm_to_vmem [thread:$0]  %s252, 768, %s254, %s243, 256, 128, 8
        $region24: #{tpu_custom_call.1} parent=15 // pred_fallthru
          _
      $region16: #{tpu_custom_call.1} parent=5 // pred_fallthru
        _
      %p260 = scmp.le.s32.totalorder 1, %s27
      %p261 = scmp.lt.s32.totalorder %s27, 3
      %p262 = pnand %p260, %p261
      %p263 = pneg %p262
      // Predicated region
      $region25: #{tpu_custom_call.1} parent=5 // pred_check
        _
      $region26: #{tpu_custom_call.1} parent=5 // pred_check_branch
        %265 = sbr.rel (%p262) target = $region28
      $region27: #{tpu_custom_call.1} parent=5 // pred_region
        %s266 = ssub.s32 %s27, 1
        %s267 = sand.u32 %s54, 1
        %s268 = scalar_lea.sflag [#allocation3], %s267
        %s269 = sand.u32 %s54, 1
        %s270 = smul.addr %s269, 48
        %s271 = scalar_lea.vmem [#allocation2], %s270
        // Predicated region
        $region29: #{tpu_custom_call.1} parent=27 // pred_check
          %p272 = pneg %p67
        $region30: #{tpu_custom_call.1} parent=27 // pred_check_branch
          %274 = sbr.rel (%p272) target = $region32
        $region31: #{tpu_custom_call.1} parent=27 // pred_region
          %275 = dma.done %s268, 768
        $region32: #{tpu_custom_call.1} parent=27 // pred_fallthru
          _
        %s276 = sand.u32 %s82, 1
        %s277 = scalar_lea.sflag [#allocation6], %s276
        %s278 = sand.u32 %s82, 1
        %s279 = smul.addr %s278, 48
        %s280 = scalar_lea.vmem [#allocation5], %s279
        // Predicated region
        $region33: #{tpu_custom_call.1} parent=27 // pred_check
          %p281 = pneg %p95
        $region34: #{tpu_custom_call.1} parent=27 // pred_check_branch
          %283 = sbr.rel (%p281) target = $region36
        $region35: #{tpu_custom_call.1} parent=27 // pred_region
          %284 = dma.done %s277, 768
        $region36: #{tpu_custom_call.1} parent=27 // pred_fallthru
          _
        %s285 = sand.u32 %s54, 1
        %s286 = scalar_lea.sflag [#allocation3], %s285
        %s287 = sand.u32 %s54, 1
        %s288 = smul.addr %s287, 48
        %s289 = scalar_lea.vmem [#allocation2], %s288
        %p290 = pneg %p67
        %p291 = pneg %p64
        %s292 = sand.u32 %s82, 1
        %s293 = scalar_lea.sflag [#allocation6], %s292
        %s294 = sand.u32 %s82, 1
        %s295 = smul.addr %s294, 48
        %s296 = scalar_lea.vmem [#allocation5], %s295
        %p297 = pneg %p95
        %p298 = pneg %p92
        %p299 = pneg %p121
        %p300 = pneg %p118
        %s301 = sand.u32 %s108, 1
        %s302 = scalar_lea.sflag [#allocation4], %s301
        %s303 = sand.u32 %s108, 1
        %s304 = smul.addr %s303, 24
        %s305 = scalar_lea.vmem [#allocation7], %s304
        %p306 = pneg %p147
        %p307 = pneg %p144
        %s308 = sand.u32 %s32, 1
        %s309 = scalar_lea.sflag [#allocation9], %s308
        %s310 = sand.u32 %s134, 1
        %s311 = smul.addr %s310, 24
        %s312 = scalar_lea.vmem [#allocation8], %s311
        %p313 = pneg %p173
        %p314 = pneg %p170
        %s315 = sand.u32 %s32, 1
        %s316 = scalar_lea.sflag [#allocation9], %s315
        %s317 = sand.u32 %s160, 1
        %s318 = smul.addr %s317, 16
        %s319 = scalar_lea.vmem [#allocation10], %s318
        %p320 = pneg %p199
        %p321 = pneg %p196
        %s322 = sand.u32 %s186, 1
        %s323 = scalar_lea.sflag [#allocation12], %s322
        %s324 = sand.u32 %s186, 1
        %s325 = smul.addr %s324, 16
        %s326 = scalar_lea.vmem [#allocation11], %s325
        %s327 = sadd.s32 %s36, %s37
        %s328 = sadd.s32 %s36, %s37
        %p329 = scmp.eq.s32.totalorder %s37, 0
        // Predicated region
        $region37: #{tpu_custom_call.1} parent=27 // pred_check
          %p330 = pneg %p329
        $region38: #{tpu_custom_call.1} parent=27 // pred_check_branch
          %332 = sbr.rel (%p330) target = $region40
        $region39: #{tpu_custom_call.1} parent=27 // pred_region
          %333 = vst [vmem:[%s305] sm:$0xff] 0.0
          %334 = vst [vmem:[%s305 + $0x8] sm:$0xff] 0.0
          %335 = vst [vmem:[%s305 + $0x10] sm:$0xff] 0.0
          %336 = vst [vmem:[%s312] sm:$0xff] 0.0
          %337 = vst [vmem:[%s312 + $0x8] sm:$0xff] 0.0
          %338 = vst [vmem:[%s312 + $0x10] sm:$0xff] 0.0
          %339 = vst [vmem:[%s319] sm:$0xff] 0.0
          %340 = vst [vmem:[%s319 + $0x8] sm:$0xff] 0.0
          %341 = vst [vmem:[%s326] sm:$0xff] 0.0
          %342 = vst [vmem:[%s326 + $0x8] sm:$0xff] 0.0
        $region40: #{tpu_custom_call.1} parent=27 // pred_fallthru
          _
        %v343 = vld [vmem:[%s271] sm:$0xff]
        %v344 = vld [vmem:[%s271 + $0x8] sm:$0xff]
        %v345 = vld [vmem:[%s271 + $0x10] sm:$0xff]
        %v346 = vld [vmem:[%s271 + $0x18] sm:$0xff]
        %v347 = vld [vmem:[%s271 + $0x20] sm:$0xff]
        %v348 = vld [vmem:[%s271 + $0x28] sm:$0xff]
        %v349 = vmax.f32 %v343, 1e-06
        %v350 = vmax.f32 %v346, 1e-06
        %v351 = vlog2.pop %v349
        %v352 = vmul.f32 %v351, 0.6931472
        %v353 = vlog2.pop %v350
        %v354 = vmul.f32 %v353, 0.6931472
        %v355 = vmul.f32 %v352, -0.55611587
        %v356 = vmul.f32 %v354, -0.55611587
        %v357 = vmax.f32 %v344, 1e-06
        %v358 = vmax.f32 %v347, 1e-06
        %v359 = vlog2.pop %v357
        %v360 = vmul.f32 %v359, 0.6931472
        %v361 = vlog2.pop %v358
        %v362 = vmul.f32 %v361, 0.6931472
        %v363 = vmul.f32 %v360, -0.1355218
        %v364 = vmul.f32 %v362, -0.1355218
        %v365 = vadd.f32 %v355, %v363
        %v366 = vadd.f32 %v356, %v364
        %v367 = vmax.f32 %v345, 1e-06
        %v368 = vmax.f32 %v348, 1e-06
        %v369 = vlog2.pop %v367
        %v370 = vmul.f32 %v369, 0.6931472
        %v371 = vlog2.pop %v368
        %v372 = vmul.f32 %v371, 0.6931472
        %v373 = vmul.f32 %v370, 1.5735881
        %v374 = vmul.f32 %v372, 1.5735881
        %v375 = vadd.f32 %v365, %v373
        %v376 = vadd.f32 %v366, %v374
        %v377 = vmin.f32 %v375, 0.0
        %v378 = vmin.f32 %v376, 0.0
        %v379 = vmul.f32 %v377, 0.27
        %v380 = vmul.f32 %v378, 0.27
        %v381 = vmul.f32 %v379, 1.442695
        %v382 = vpow.pop %v381
        %v383 = vmul.f32 %v380, 1.442695
        %v384 = vpow.pop %v383
        %v385 = vmul.f32 %v382, 0.2125
        %v386 = vmul.f32 %v384, 0.2125
        %v387 = vmul.f32 %v377, 0.57
        %v388 = vmul.f32 %v378, 0.57
        %v389 = vmul.f32 %v387, 1.442695
        %v390 = vpow.pop %v389
        %v391 = vmul.f32 %v388, 1.442695
        %v392 = vpow.pop %v391
        %v393 = vmul.f32 %v390, 0.7154
        %v394 = vmul.f32 %v392, 0.7154
        %v395 = vadd.f32 %v385, %v393
        %v396 = vadd.f32 %v386, %v394
        %v397 = vmul.f32 %v377, 0.78
        %v398 = vmul.f32 %v378, 0.78
        %v399 = vmul.f32 %v397, 1.442695
        %v400 = vpow.pop %v399
        %v401 = vmul.f32 %v398, 1.442695
        %v402 = vpow.pop %v401
        %v403 = vmul.f32 %v400, 0.0721
        %v404 = vmul.f32 %v402, 0.0721
        %v405 = vadd.f32 %v395, %v403
        %v406 = vadd.f32 %v396, %v404
        %v407 = vadd.f32 %v405, 0.018075528
        %v408 = vadd.f32 %v406, 0.018075528
        %v409 = vlog2.pop %v407
        %v410 = vmul.f32 %v409, 0.6931472
        %v411 = vlog2.pop %v408
        %v412 = vmul.f32 %v411, 0.6931472
        %v413 = vmul.f32 %v410, -0.4342945
        %v414 = vmul.f32 %v412, -0.4342945
        %v415 = vmax.f32 %v413, 0.0
        %v416 = vmax.f32 %v414, 0.0
        %vm417 = vcmp.gt.f32.partialorder %v415, 0.0
        %vm418 = vcmp.gt.f32.partialorder %v416, 0.0
        %v419 = vmax.f32 %v415, 1e-30
        %v420 = vmax.f32 %v416, 1e-30
        %v421 = vlog2.pop %v419
        %v422 = vmul.f32 %v421, 0.6931472
        %v423 = vlog2.pop %v420
        %v424 = vmul.f32 %v423, 0.6931472
        %v425 = vmul.f32 %v422, 1.8
        %v426 = vmul.f32 %v424, 1.8
        %v427 = vmul.f32 %v425, 1.442695
        %v428 = vpow.pop %v427
        %v429 = vmul.f32 %v426, 1.442695
        %v430 = vpow.pop %v429
        %v431 = vsel %vm417, %v428, 0.0
        %v432 = vsel %vm418, %v430, 0.0
        %vm433 = vcmp.lt.f32.partialorder %v431, 0.15
        %vm434 = vcmp.lt.f32.partialorder %v432, 0.15
        %v435 = vsel %vm433, 0.0, %v431
        %v436 = vsel %vm434, 0.0, %v432
        %v437 = vld [vmem:[%s319] sm:$0xff]
        %v438 = vadd.f32 %v435, 0.0
        %v439 = vadd.f32 %v437, %v438
        %440 = vst [vmem:[%s319] sm:$0xff] %v439
        %s441 = scalar_lea.vmem %s319, 8 [#allocation10]
        %v442 = vld [vmem:[%s441] sm:$0xff]
        %v443 = vadd.f32 %v436, 0.0
        %v444 = vadd.f32 %v442, %v443
        %445 = vst [vmem:[%s441] sm:$0xff] %v444
        %v446 = vld [vmem:[%s305] sm:$0xff]
        %v447 = vmul.f32 %v431, %v431
        %v448 = vadd.f32 %v447, 0.0
        %v449 = vadd.f32 %v446, %v448
        %450 = vst [vmem:[%s305] sm:$0xff] %v449
        %s451 = scalar_lea.vmem %s305, 8 [#allocation7]
        %v452 = vld [vmem:[%s451] sm:$0xff]
        %v453 = vmul.f32 %v431, %v432
        %v454 = vadd.f32 %v453, 0.0
        %v455 = vadd.f32 %v452, %v454
        %456 = vst [vmem:[%s451] sm:$0xff] %v455
        %s457 = scalar_lea.vmem %s305, 16 [#allocation7]
        %v458 = vld [vmem:[%s457] sm:$0xff]
        %v459 = vmul.f32 %v432, %v432
        %v460 = vadd.f32 %v459, 0.0
        %v461 = vadd.f32 %v458, %v460
        %462 = vst [vmem:[%s457] sm:$0xff] %v461
        %v463 = vld [vmem:[%s280] sm:$0xff]
        %v464 = vld [vmem:[%s280 + $0x8] sm:$0xff]
        %v465 = vld [vmem:[%s280 + $0x10] sm:$0xff]
        %v466 = vld [vmem:[%s280 + $0x18] sm:$0xff]
        %v467 = vld [vmem:[%s280 + $0x20] sm:$0xff]
        %v468 = vld [vmem:[%s280 + $0x28] sm:$0xff]
        %v469 = vmax.f32 %v463, 1e-06
        %v470 = vmax.f32 %v466, 1e-06
        %v471 = vlog2.pop %v469
        %v472 = vmul.f32 %v471, 0.6931472
        %v473 = vlog2.pop %v470
        %v474 = vmul.f32 %v473, 0.6931472
        %v475 = vmul.f32 %v472, -0.55611587
        %v476 = vmul.f32 %v474, -0.55611587
        %v477 = vmax.f32 %v464, 1e-06
        %v478 = vmax.f32 %v467, 1e-06
        %v479 = vlog2.pop %v477
        %v480 = vmul.f32 %v479, 0.6931472
        %v481 = vlog2.pop %v478
        %v482 = vmul.f32 %v481, 0.6931472
        %v483 = vmul.f32 %v480, -0.1355218
        %v484 = vmul.f32 %v482, -0.1355218
        %v485 = vadd.f32 %v475, %v483
        %v486 = vadd.f32 %v476, %v484
        %v487 = vmax.f32 %v465, 1e-06
        %v488 = vmax.f32 %v468, 1e-06
        %v489 = vlog2.pop %v487
        %v490 = vmul.f32 %v489, 0.6931472
        %v491 = vlog2.pop %v488
        %v492 = vmul.f32 %v491, 0.6931472
        %v493 = vmul.f32 %v490, 1.5735881
        %v494 = vmul.f32 %v492, 1.5735881
        %v495 = vadd.f32 %v485, %v493
        %v496 = vadd.f32 %v486, %v494
        %v497 = vmin.f32 %v495, 0.0
        %v498 = vmin.f32 %v496, 0.0
        %v499 = vmul.f32 %v497, 0.27
        %v500 = vmul.f32 %v498, 0.27
        %v501 = vmul.f32 %v499, 1.442695
        %v502 = vpow.pop %v501
        %v503 = vmul.f32 %v500, 1.442695
        %v504 = vpow.pop %v503
        %v505 = vmul.f32 %v502, 0.2125
        %v506 = vmul.f32 %v504, 0.2125
        %v507 = vmul.f32 %v497, 0.57
        %v508 = vmul.f32 %v498, 0.57
        %v509 = vmul.f32 %v507, 1.442695
        %v510 = vpow.pop %v509
        %v511 = vmul.f32 %v508, 1.442695
        %v512 = vpow.pop %v511
        %v513 = vmul.f32 %v510, 0.7154
        %v514 = vmul.f32 %v512, 0.7154
        %v515 = vadd.f32 %v505, %v513
        %v516 = vadd.f32 %v506, %v514
        %v517 = vmul.f32 %v497, 0.78
        %v518 = vmul.f32 %v498, 0.78
        %v519 = vmul.f32 %v517, 1.442695
        %v520 = vpow.pop %v519
        %v521 = vmul.f32 %v518, 1.442695
        %v522 = vpow.pop %v521
        %v523 = vmul.f32 %v520, 0.0721
        %v524 = vmul.f32 %v522, 0.0721
        %v525 = vadd.f32 %v515, %v523
        %v526 = vadd.f32 %v516, %v524
        %v527 = vadd.f32 %v525, 0.018075528
        %v528 = vadd.f32 %v526, 0.018075528
        %v529 = vlog2.pop %v527
        %v530 = vmul.f32 %v529, 0.6931472
        %v531 = vlog2.pop %v528
        %v532 = vmul.f32 %v531, 0.6931472
        %v533 = vmul.f32 %v530, -0.4342945
        %v534 = vmul.f32 %v532, -0.4342945
        %v535 = vmax.f32 %v533, 0.0
        %v536 = vmax.f32 %v534, 0.0
        %vm537 = vcmp.gt.f32.partialorder %v535, 0.0
        %vm538 = vcmp.gt.f32.partialorder %v536, 0.0
        %v539 = vmax.f32 %v535, 1e-30
        %v540 = vmax.f32 %v536, 1e-30
        %v541 = vlog2.pop %v539
        %v542 = vmul.f32 %v541, 0.6931472
        %v543 = vlog2.pop %v540
        %v544 = vmul.f32 %v543, 0.6931472
        %v545 = vmul.f32 %v542, 1.8
        %v546 = vmul.f32 %v544, 1.8
        %v547 = vmul.f32 %v545, 1.442695
        %v548 = vpow.pop %v547
        %v549 = vmul.f32 %v546, 1.442695
        %v550 = vpow.pop %v549
        %v551 = vsel %vm537, %v548, 0.0
        %v552 = vsel %vm538, %v550, 0.0
        %vm553 = vcmp.lt.f32.partialorder %v551, 0.15
        %vm554 = vcmp.lt.f32.partialorder %v552, 0.15
        %v555 = vsel %vm553, 0.0, %v551
        %v556 = vsel %vm554, 0.0, %v552
        %v557 = vld [vmem:[%s326] sm:$0xff]
        %v558 = vadd.f32 %v555, 0.0
        %v559 = vadd.f32 %v557, %v558
        %560 = vst [vmem:[%s326] sm:$0xff] %v559
        %s561 = scalar_lea.vmem %s326, 8 [#allocation11]
        %v562 = vld [vmem:[%s561] sm:$0xff]
        %v563 = vadd.f32 %v556, 0.0
        %v564 = vadd.f32 %v562, %v563
        %565 = vst [vmem:[%s561] sm:$0xff] %v564
        %v566 = vld [vmem:[%s312] sm:$0xff]
        %v567 = vmul.f32 %v551, %v551
        %v568 = vadd.f32 %v567, 0.0
        %v569 = vadd.f32 %v566, %v568
        %570 = vst [vmem:[%s312] sm:$0xff] %v569
        %s571 = scalar_lea.vmem %s312, 8 [#allocation8]
        %v572 = vld [vmem:[%s571] sm:$0xff]
        %v573 = vmul.f32 %v551, %v552
        %v574 = vadd.f32 %v573, 0.0
        %v575 = vadd.f32 %v572, %v574
        %576 = vst [vmem:[%s571] sm:$0xff] %v575
        %s577 = scalar_lea.vmem %s312, 16 [#allocation8]
        %v578 = vld [vmem:[%s577] sm:$0xff]
        %v579 = vmul.f32 %v552, %v552
        %v580 = vadd.f32 %v579, 0.0
        %v581 = vadd.f32 %v578, %v580
        %582 = vst [vmem:[%s577] sm:$0xff] %v581
        %s583 = sand.u32 %s108, 1
        %s584 = scalar_lea.sflag [#allocation4], %s583
        %s585 = sand.u32 %s108, 1
        %s586 = smul.addr %s585, 24
        %s587 = scalar_lea.vmem [#allocation7], %s586
        %s588 = sand.u32 %s32, 1
        %s589 = scalar_lea.sflag [#allocation9], %s588
        %s590 = sand.u32 %s134, 1
        %s591 = smul.addr %s590, 24
        %s592 = scalar_lea.vmem [#allocation8], %s591
        %s593 = sand.u32 %s32, 1
        %s594 = scalar_lea.sflag [#allocation9], %s593
        %s595 = sand.u32 %s160, 1
        %s596 = smul.addr %s595, 16
        %s597 = scalar_lea.vmem [#allocation10], %s596
        %s598 = sand.u32 %s186, 1
        %s599 = scalar_lea.sflag [#allocation12], %s598
        %s600 = sand.u32 %s186, 1
        %s601 = smul.addr %s600, 16
        %s602 = scalar_lea.vmem [#allocation11], %s601
        // Predicated region
        $region41: #{tpu_custom_call.1} parent=27 // pred_check
          %p603 = pneg %p118
        $region42: #{tpu_custom_call.1} parent=27 // pred_check_branch
          %605 = sbr.rel (%p603) target = $region44
        $region43: #{tpu_custom_call.1} parent=27 // pred_region
          %s607 = ssub.s32 384, 384
          %608 = vsyncadd %s584, %s607
          %s609 = smul.addr %s36, 3
          %s610 = smul.addr %s609, 128
          %s611 = scalar_lea.hbm %s2, %s610
          %s612 = sshll.u32 %s587, 4
          %s613 = int_to_ptr.vmem [resolvable:$true] %s612
          %618 = dma.vmem_to_hbm [thread:$0]  %s613, 384, %s611, %s584, 128, 128, 8
        $region44: #{tpu_custom_call.1} parent=27 // pred_fallthru
          _
        // Predicated region
        $region45: #{tpu_custom_call.1} parent=27 // pred_check
          %p619 = pneg %p144
        $region46: #{tpu_custom_call.1} parent=27 // pred_check_branch
          %621 = sbr.rel (%p619) target = $region48
        $region47: #{tpu_custom_call.1} parent=27 // pred_region
          %s623 = ssub.s32 384, 384
          %624 = vsyncadd %s589, %s623
          %s625 = smul.addr %s36, 3
          %s626 = smul.addr %s625, 128
          %s627 = scalar_lea.hbm %s3, %s626
          %s628 = sshll.u32 %s592, 4
          %s629 = int_to_ptr.vmem [resolvable:$true] %s628
          %634 = dma.vmem_to_hbm [thread:$0]  %s629, 384, %s627, %s589, 128, 128, 8
        $region48: #{tpu_custom_call.1} parent=27 // pred_fallthru
          _
        // Predicated region
        $region49: #{tpu_custom_call.1} parent=27 // pred_check
          %p635 = pneg %p170
        $region50: #{tpu_custom_call.1} parent=27 // pred_check_branch
          %637 = sbr.rel (%p635) target = $region52
        $region51: #{tpu_custom_call.1} parent=27 // pred_region
          %s639 = ssub.s32 256, 256
          %640 = vsyncadd %s594, %s639
          %s641 = smul.addr %s36, 2
          %s642 = smul.addr %s641, 128
          %s643 = scalar_lea.hbm %s4, %s642
          %s644 = sshll.u32 %s597, 4
          %s645 = int_to_ptr.vmem [resolvable:$true] %s644
          %650 = dma.vmem_to_hbm [thread:$0]  %s645, 256, %s643, %s594, 128, 128, 8
        $region52: #{tpu_custom_call.1} parent=27 // pred_fallthru
          _
        // Predicated region
        $region53: #{tpu_custom_call.1} parent=27 // pred_check
          %p651 = pneg %p196
        $region54: #{tpu_custom_call.1} parent=27 // pred_check_branch
          %653 = sbr.rel (%p651) target = $region56
        $region55: #{tpu_custom_call.1} parent=27 // pred_region
          %s655 = ssub.s32 256, 256
          %656 = vsyncadd %s599, %s655
          %s657 = smul.addr %s36, 2
          %s658 = smul.addr %s657, 128
          %s659 = scalar_lea.hbm %s5, %s658
          %s660 = sshll.u32 %s602, 4
          %s661 = int_to_ptr.vmem [resolvable:$true] %s660
          %666 = dma.vmem_to_hbm [thread:$0]  %s661, 256, %s659, %s599, 128, 128, 8
        $region56: #{tpu_custom_call.1} parent=27 // pred_fallthru
          _
      $region28: #{tpu_custom_call.1} parent=5 // pred_fallthru
        _
      %p667 = scmp.le.s32.totalorder 2, %s27
      // Predicated region
      $region57: #{tpu_custom_call.1} parent=5 // pred_check
        %p668 = pneg %p667
      $region58: #{tpu_custom_call.1} parent=5 // pred_check_branch
        %670 = sbr.rel (%p668) target = $region60
      $region59: #{tpu_custom_call.1} parent=5 // pred_region
        %s671 = ssub.s32 %s27, 2
        // Predicated region
        $region61: #{tpu_custom_call.1} parent=59 // pred_check
          %p672 = pneg %p124
        $region62: #{tpu_custom_call.1} parent=59 // pred_check_branch
          %674 = sbr.rel (%p672) target = $region64
        $region63: #{tpu_custom_call.1} parent=59 // pred_region
          %s675 = sand.u32 %s109, 1
          %s676 = scalar_lea.sflag [#allocation4], %s675
          %s677 = sand.u32 %s109, 1
          %s678 = smul.addr %s677, 24
          %s679 = scalar_lea.vmem [#allocation7], %s678
          %680 = dma.done %s676, 384
        $region64: #{tpu_custom_call.1} parent=59 // pred_fallthru
          _
        // Predicated region
        $region65: #{tpu_custom_call.1} parent=59 // pred_check
          %p681 = pneg %p150
        $region66: #{tpu_custom_call.1} parent=59 // pred_check_branch
          %683 = sbr.rel (%p681) target = $region68
        $region67: #{tpu_custom_call.1} parent=59 // pred_region
          %s684 = sand.u32 %s33, 1
          %s685 = scalar_lea.sflag [#allocation9], %s684
          %s686 = sand.u32 %s135, 1
          %s687 = smul.addr %s686, 24
          %s688 = scalar_lea.vmem [#allocation8], %s687
          %689 = dma.done %s685, 384
        $region68: #{tpu_custom_call.1} parent=59 // pred_fallthru
          _
        // Predicated region
        $region69: #{tpu_custom_call.1} parent=59 // pred_check
          %p690 = pneg %p176
        $region70: #{tpu_custom_call.1} parent=59 // pred_check_branch
          %692 = sbr.rel (%p690) target = $region72
        $region71: #{tpu_custom_call.1} parent=59 // pred_region
          %s693 = sand.u32 %s33, 1
          %s694 = scalar_lea.sflag [#allocation9], %s693
          %s695 = sand.u32 %s161, 1
          %s696 = smul.addr %s695, 16
          %s697 = scalar_lea.vmem [#allocation10], %s696
          %698 = dma.done %s694, 256
        $region72: #{tpu_custom_call.1} parent=59 // pred_fallthru
          _
        // Predicated region
        $region73: #{tpu_custom_call.1} parent=59 // pred_check
          %p699 = pneg %p202
        $region74: #{tpu_custom_call.1} parent=59 // pred_check_branch
          %701 = sbr.rel (%p699) target = $region76
        $region75: #{tpu_custom_call.1} parent=59 // pred_region
          %s702 = sand.u32 %s187, 1
          %s703 = scalar_lea.sflag [#allocation12], %s702
          %s704 = sand.u32 %s187, 1
          %s705 = smul.addr %s704, 16
          %s706 = scalar_lea.vmem [#allocation11], %s705
          %707 = dma.done %s703, 256
        $region76: #{tpu_custom_call.1} parent=59 // pred_fallthru
          _
      $region60: #{tpu_custom_call.1} parent=5 // pred_fallthru
        _
    $region6: #{tpu_custom_call.1} parent=1 // loop_footer
      %s31 = sadd.s32 1, %s27
    $region7: #{tpu_custom_call.1} parent=1 // loop_footer_branch
      %26 = sbr.rel target = $region3
    $region8: #{tpu_custom_call.1} parent=1 // loop_exit
      _
    %708 = vsyncpa [#allocation3], 1
    %s709 = scalar_lea.sflag [#allocation3], 1
    %710 = vsyncpa %s709, 1
    %711 = vsyncpa [#allocation6], 1
    %s712 = scalar_lea.sflag [#allocation6], 1
    %713 = vsyncpa %s712, 1
    %714 = vsyncpa [#allocation4], 1
    %s715 = scalar_lea.sflag [#allocation4], 1
    %716 = vsyncpa %s715, 1
    %717 = vsyncpa [#allocation9], 1
    %s718 = scalar_lea.sflag [#allocation9], 1
    %719 = vsyncpa %s718, 1
    %720 = vsyncpa [#allocation12], 1
    %s721 = scalar_lea.sflag [#allocation12], 1
    %722 = vsyncpa %s721, 1

</llo_original>
